<compile_context>
chip_gen: v7x
topology: tpu7x:2x2x1
jax: 0.10.0
libtpu: 0.0.40
codegen_flags: <defaults>
</compile_context>

<pallas_src>
import jax
import jax.numpy as jnp
from jax.experimental import pallas as pl
from jax.experimental.pallas import tpu as pltpu


LANE = 1024                       # lane width: large multiple of 128 -> unmasked, lane-dense stores
TILE_BYTES_MAX = 8 * 1024 * 1024  # per-buffer tile target; 4 live buffers => <= 32 MiB resident
SMALL_BYTES = 256 * 1024          # below this, plain XLA sigmoid beats kernel launch overhead


def _sigmoid_kernel(x_ref, o_ref):
    # Elementwise sigmoid on the current VMEM tile (exp -> EUP, add/div -> VPU;
    # both have huge slack in this HBM-bound kernel).
    o_ref[...] = jax.nn.sigmoid(x_ref[...])


def _vmem_capacity_bytes() -> int:
    """Per-core VMEM capacity; conservative (v7x) fallback if the query fails."""
    try:
        return int(pltpu.get_tpu_info().vmem_capacity_bytes)
    except Exception:
        return 64 * 1024 * 1024


def _sublane(itemsize: int) -> int:
    # Native sublane packing granularity per dtype width.
    return {4: 8, 2: 16, 1: 32}.get(itemsize, 8)


def _sigmoid_2d(x2d: jax.Array) -> jax.Array:
    """Pallas sigmoid over a lane-dense (rows, LANE) slab. No padding, no extra copies."""
    rows, lane = x2d.shape
    itemsize = jnp.dtype(x2d.dtype).itemsize
    sub = _sublane(itemsize)

    # Generation-aware tile sizing: 4 live buffers (in + out, double buffered);
    # keep them under ~3/4 of this chip's VMEM, but never above TILE_BYTES_MAX.
    vmem_cap = _vmem_capacity_bytes()
    tile_bytes = min(TILE_BYTES_MAX,
                     max(lane * itemsize * sub, (vmem_cap * 3 // 4) // 4))
    tr_cap = max(sub, (tile_bytes // (lane * itemsize)) // sub * sub)

    if rows <= sub:
        # Tiny slab: a single full-extent block (any size allowed when block == array dim).
        tr = rows
    elif rows <= 2 * tr_cap:
        # Medium: split into ~2 balanced tiles so both v7x TensorCores get work.
        tr = ((pl.cdiv(rows, 2) + sub - 1) // sub) * sub
    else:
        # Large: stream max-size tiles; plenty of tiles for both cores.
        tr = tr_cap

    grid = (pl.cdiv(rows, tr),)  # partial last block (if any) is masked by Pallas

    n = rows * lane
    cost = pl.CostEstimate(flops=4 * n,
                           transcendentals=n,
                           bytes_accessed=2 * n * itemsize)

    # 4 live tile buffers + headroom, clamped to physical VMEM (v7x = 64 MiB).
    vmem_limit = min(vmem_cap, 4 * tr * lane * itemsize + 16 * 1024 * 1024)

    return pl.pallas_call(
        _sigmoid_kernel,
        out_shape=jax.ShapeDtypeStruct((rows, lane), x2d.dtype),
        grid=grid,
        in_specs=[pl.BlockSpec((tr, lane), lambda i: (i, 0))],
        out_specs=pl.BlockSpec((tr, lane), lambda i: (i, 0)),
        compiler_params=pltpu.CompilerParams(
            dimension_semantics=("parallel",),   # shard row tiles across v7x's 2 TCs
            vmem_limit_bytes=vmem_limit,
        ),
        cost_estimate=cost,
    )(x2d)


def sigmoid_pallas(x: jax.Array, *, force_kernel: bool = False) -> jax.Array:
    """TestModule.forward: elementwise sigmoid, streamed through a Pallas TPU kernel."""
    total = int(x.size)
    if total == 0:
        return x
    itemsize = jnp.dtype(x.dtype).itemsize

    # Small-input fast path: at KB scale the plain XLA op is strictly faster.
    if not force_kernel and total * itemsize < SMALL_BYTES:
        return jax.nn.sigmoid(x)

    flat = x.reshape(-1)              # free (metadata-only) reshape
    main = (total // LANE) * LANE
    if main == 0:                     # entire tensor smaller than one lane row
        return jax.nn.sigmoid(x)

    if main == total:
        # Aligned: pure reshape, kernel output is the final slab (no pad, no slice).
        out_flat = _sigmoid_2d(flat.reshape(main // LANE, LANE)).reshape(-1)
    else:
        # Ragged: kernel on the aligned prefix; tiny tail (< LANE elems) via XLA.
        out_main = _sigmoid_2d(flat[:main].reshape(main // LANE, LANE)).reshape(-1)
        out_tail = jax.nn.sigmoid(flat[main:])
        out_flat = jnp.concatenate([out_main, out_tail])

    return out_flat.reshape(x.shape)


if __name__ == "__main__":
    # TestModule has no parameters; forward only applies sigmoid (ReLU is unused).
    key = jax.random.PRNGKey(0)
    k0, k1 = jax.random.split(key)

    # Shape implied by the module's NCHW usage: batch=2, channels=4, 16x16 spatial.
    x = jax.random.normal(k0, (2, 4, 16, 16), dtype=jnp.float32)
    out = sigmoid_pallas(x, force_kernel=True)   # force the Pallas path for the test
    out = jax.block_until_ready(out)

    ref = jax.nn.sigmoid(x)
    assert out.shape == x.shape
    assert jnp.max(jnp.abs(out - ref)) < 1e-6

    # Also exercise the ragged-tail path (total not a multiple of LANE).
    x2 = jax.random.normal(k1, (3, 5, 17, 13), dtype=jnp.float32)
    out2 = jax.block_until_ready(sigmoid_pallas(x2, force_kernel=True))
    ref2 = jax.nn.sigmoid(x2)
    assert out2.shape == x2.shape
    assert jnp.max(jnp.abs(out2 - ref2)) < 1e-6

    print("KERNEL_OK")
</pallas_src>

<mosaic_0001>
module attributes {stable_mosaic.version = 11 : i64} {
  func.func @_sigmoid_kernel(%arg0: i32, %arg1: memref<2x1024xf32, #tpu.memory_space<vmem>>, %arg2: memref<2x1024xf32, #tpu.memory_space<vmem>>) attributes {dimension_semantics = [#tpu.dimension_semantics<parallel>], iteration_bounds = array<i64: 1>, scalar_prefetch = 0 : i64, scratch_operands = 0 : i64, tpu.core_type = #tpu.core_type<tc>, window_params = [{transform_indices = @transform_0, window_bounds = array<i64: 2, 1024>}, {transform_indices = @transform_1, window_bounds = array<i64: 2, 1024>}]} {
    %c0 = arith.constant 0 : index
    %c0_0 = arith.constant 0 : index
    %0 = vector.load %arg1[%c0, %c0_0] : memref<2x1024xf32, #tpu.memory_space<vmem>>, vector<2x1024xf32>
    %1 = arith.negf %0 : vector<2x1024xf32>
    %2 = math.exp %1 : vector<2x1024xf32>
    %cst = arith.constant 1.000000e+00 : f32
    %3 = vector.broadcast %cst : f32 to vector<2x1024xf32>
    %4 = arith.addf %3, %2 : vector<2x1024xf32>
    %5 = arith.divf %3, %4 : vector<2x1024xf32>
    %c0_1 = arith.constant 0 : index
    %c0_2 = arith.constant 0 : index
    %6 = vector.load %arg2[%c0_1, %c0_2] : memref<2x1024xf32, #tpu.memory_space<vmem>>, vector<2x1024xf32>
    tpu.vector_store %arg2[%c0_1, %c0_2], %5 {strides = array<i32>} : memref<2x1024xf32, #tpu.memory_space<vmem>>, vector<2x1024xf32>,
    return
  }
  func.func @transform_0(%arg0: i32) -> (i32, i32) {
    %c0_i32 = arith.constant 0 : i32
    %c0_i32_0 = arith.constant 0 : i32
    return %arg0, %c0_i32 : i32, i32
  }
  func.func @transform_1(%arg0: i32) -> (i32, i32) {
    %c0_i32 = arith.constant 0 : i32
    %c0_i32_0 = arith.constant 0 : i32
    return %arg0, %c0_i32 : i32, i32
  }
}

</mosaic_0001>

<llo_original>
// kernel: tpu_custom_call.1
$region0: #{tpu_custom_call.1}
  #allocation0 [shape = 'u32[]', space=smem, size = 0x4, offset = 0x4, fixed_abs, tag = 'smem constant byte address 0x4 - core index']
  #allocation1 [shape = 'u32[144,128]{1,0:T(1,128)}', space=vmem, size = 0x12000, scoped, tag = 'internal scratch']
  %s0 = inlined_call_operand.hbm [shape: f32[2,1024], index: 0, kind: input, shape index: {}]
  %s1 = inlined_call_operand.hbm [shape: f32[2,1024], index: 1, kind: output, shape index: {}]
  %s2 = sld [smem:[#allocation0]]
  $region18: #{tpu_custom_call.1} parent=0
    _
  %s4 = ssub.s32 1, %s2
  %s5 = scalar_select 0, %s4, %s2
  $region1: #{tpu_custom_call.1} parent=0
    #allocation2 [shape = 'u8[8192]{0}', space=vmem, size = 0x2000, scoped, tag = 'input window, operand 0, single buffered']
    #allocation3 [shape = 's32[1]{0}', space=sflag, size = 0x4, scoped, tag = 'scoped memory for tpu_custom_call.1']
    #allocation4 [shape = 's32[1]{0}', space=sflag, size = 0x4, scoped, tag = 'scoped memory for tpu_custom_call.1']
    #allocation5 [shape = 'u8[8192]{0}', space=vmem, size = 0x2000, scoped, tag = 'output window, operand 0, single buffered']
    %6 = vsyncpa [#allocation3], 0
    %7 = vsyncpa [#allocation4], 0
    // Predicated region
    $region2: #{tpu_custom_call.1} parent=1 // pred_check
      _
    $region3: #{tpu_custom_call.1} parent=1 // pred_check_branch
      %9 = sbr.rel (0) target = $region5
    $region4: #{tpu_custom_call.1} parent=1 // pred_region
      %s11 = ssub.s32 256, 256
      %12 = vsyncadd [#allocation3], %s11
      %s14 = sshll.u32 [#allocation2], 4
      %s15 = int_to_ptr.vmem [resolvable:$true] %s14
      %17 = dma.hbm_to_vmem [thread:$0]  %s0, 256, %s15, [#allocation3]
    $region5: #{tpu_custom_call.1} parent=1 // pred_fallthru
      _
    // Predicated region
    $region6: #{tpu_custom_call.1} parent=1 // pred_check
      _
    $region7: #{tpu_custom_call.1} parent=1 // pred_check_branch
      %19 = sbr.rel (0) target = $region9
    $region8: #{tpu_custom_call.1} parent=1 // pred_region
      %20 = dma.done [#allocation3], 256
    $region9: #{tpu_custom_call.1} parent=1 // pred_fallthru
      _
    %v21 = vld [vmem:[#allocation2] sm:$0xff]
    %v22 = vld [vmem:[#allocation2 + $0x8] sm:$0xff]
    %v23 = vxor.u32 %v21, 2147483648
    %v24 = vxor.u32 %v22, 2147483648
    %v25 = vmul.f32 %v23, 1.442695
    %v26 = vpow.pop %v25
    %v27 = vmul.f32 %v24, 1.442695
    %v28 = vpow.pop %v27
    %v29 = vadd.f32 %v26, 1.0
    %v30 = vadd.f32 %v28, 1.0
    %v31 = vrcp.pop %v29
    %v32 = vmul.f32 1.0, %v31
    %v33 = vrcp.pop %v30
    %v34 = vmul.f32 1.0, %v33
    %35 = vst [vmem:[#allocation5] sm:$0xff] %v32
    %36 = vst [vmem:[#allocation5 + $0x8] sm:$0xff] %v34
    // Predicated region
    $region10: #{tpu_custom_call.1} parent=1 // pred_check
      _
    $region11: #{tpu_custom_call.1} parent=1 // pred_check_branch
      %38 = sbr.rel (0) target = $region13
    $region12: #{tpu_custom_call.1} parent=1 // pred_region
      %s40 = ssub.s32 256, 256
      %41 = vsyncadd [#allocation4], %s40
      %s43 = sshll.u32 [#allocation5], 4
      %s44 = int_to_ptr.vmem [resolvable:$true] %s43
      %46 = dma.vmem_to_hbm [thread:$0]  %s44, 256, %s1, [#allocation4]
    $region13: #{tpu_custom_call.1} parent=1 // pred_fallthru
      _
    // Predicated region
    $region14: #{tpu_custom_call.1} parent=1 // pred_check
      _
    $region15: #{tpu_custom_call.1} parent=1 // pred_check_branch
      %48 = sbr.rel (0) target = $region17
    $region16: #{tpu_custom_call.1} parent=1 // pred_region
      %49 = dma.done [#allocation4], 256
    $region17: #{tpu_custom_call.1} parent=1 // pred_fallthru
      _
    %50 = vsyncpa [#allocation3], 1
    %51 = vsyncpa [#allocation4], 1

</llo_original>
